<compile_context>
chip_gen: v6e
topology: v6e:2x2x1
jax: 0.10.0
libtpu: 0.0.40
codegen_flags: <defaults>
</compile_context>

<pallas_src>
import numpy as np
import jax
import jax.numpy as jnp
from jax import lax
from jax.experimental import pallas as pl
from jax.experimental.pallas import tpu as pltpu

EPS = 1e-5  # ComplexBatchNorm2d default eps


def _ccn_kernel(x_ref, p_ref, o_ref):
    # x_ref: (2, N, Ct, HW)   real plane = x_ref[0], imag plane = x_ref[1]
    # p_ref: (4, N, Ct, 1)    [gamma_rr, gamma_ii, beta_r, beta_i]
    # o_ref: (2, N, Ct, HW)
    xr = x_ref[0]
    xi = x_ref[1]
    n, _, hw = xr.shape
    inv_cnt = 1.0 / float(n * hw)

    # ---- pass 1: channel-wise means over batch (axis 0) and spatial (axis 2)
    mr = jnp.sum(jnp.sum(xr, axis=2, keepdims=True), axis=0, keepdims=True) * inv_cnt
    mi = jnp.sum(jnp.sum(xi, axis=2, keepdims=True), axis=0, keepdims=True) * inv_cnt

    # ---- pass 2: exact re-centered second moments (preferred over the
    # E[x^2]-m^2 sufficient-statistics form, which cancels when |mean|>>std)
    cr = xr - mr
    ci = xi - mi
    Vrr = jnp.sum(jnp.sum(cr * cr, axis=2, keepdims=True), axis=0, keepdims=True) * inv_cnt + EPS
    Vii = jnp.sum(jnp.sum(ci * ci, axis=2, keepdims=True), axis=0, keepdims=True) * inv_cnt + EPS
    Vri = jnp.sum(jnp.sum(cr * ci, axis=2, keepdims=True), axis=0, keepdims=True) * inv_cnt

    # ---- whitening scalars (tiny (1, Ct, 1) shapes)
    trace = Vrr + Vii
    det = Vrr * Vii - Vri * Vri
    s = jnp.sqrt(det)
    # 1/(sqrt(det)*sqrt(trace+2s)) fused into one rsqrt; algebraically equal to
    # the reference, marginally earlier overflow for extreme variances only.
    inv_st = lax.rsqrt(det * (trace + 2.0 * s))
    Wrr = (Vii + s) * inv_st
    Wii = (Vrr + s) * inv_st
    Wri = -Vri * inv_st

    # ---- fold whitening + conditional affine (+ mean subtraction) into a
    # per-(N, Ct) 2x2 matrix and bias, reproducing the reference quirks:
    #   gamma_ri = gamma_rr  and  out_im uses the *updated* out_real.
    #   out_real = grr*(nr + ni) = A11*cr + A12*ci
    #   out_im   = grr*out_real + gii*ni = A21*cr + A22*ci
    grr = p_ref[0]                        # (N, Ct, 1)
    gii = p_ref[1]
    br = p_ref[2]
    bi = p_ref[3]

    A11 = grr * (Wrr + Wri)
    A12 = grr * (Wri + Wii)
    A21 = grr * A11 + gii * Wri
    A22 = grr * A12 + gii * Wii
    b1 = br - A11 * mr - A12 * mi
    b2 = bi - A21 * mr - A22 * mi

    # ---- single fused apply pass (one read of x, one write of out per plane)
    o_ref[0] = A11 * xr + A12 * xi + b1
    o_ref[1] = A21 * xr + A22 * xi + b2


def _hardware_budget():
    """Generation-aware VMEM budgets. Returns
    (target_data_block_bytes, vmem_limit_bytes, min_grid_steps)."""
    try:
        info = pltpu.get_tpu_info()
        vmem_cap = int(getattr(info, "vmem_capacity_bytes", 0)) or (64 << 20)
    except Exception:
        vmem_cap = 64 << 20  # conservative: assume v7x-sized (64 MiB) VMEM
    if vmem_cap >= (96 << 20):
        # v5e / v6e: 128 MiB VMEM, 1 TensorCore -> large tiles, >=2 grid steps
        return 12 << 20, 96 << 20, 2          # ~6 MiB per complex plane
    # v7x: 64 MiB VMEM, 2 TensorCores sharding the 'parallel' axis -> smaller
    # tiles, >=4 grid steps so each core still double-buffers.
    return 3 << 20, 48 << 20, 4               # ~1.5 MiB per complex plane


def _pick_c_tile(N, C, HW, target_data_block_bytes, min_steps):
    """Largest multiple-of-8 divisor of C whose (2, N, c_tile, HW) f32 data
    block fits the per-generation budget, preferring at least `min_steps`
    grid steps (pipelining / megacore double-buffering)."""
    cands = [t for t in range(8, C + 1, 8) if C % t == 0]
    if not cands:
        return C  # C < 8 or no aligned divisor: single full-channel block
    fitting = [t for t in cands if 2 * N * t * HW * 4 <= target_data_block_bytes]
    pool = fitting if fitting else [min(cands)]
    for steps in sorted({min_steps, 2}, reverse=True):
        multi = [t for t in pool if C // t >= steps]
        if multi:
            return max(multi)
    return max(pool)


def complex_conditional_norm(x_planar, class_labels, embed_weight, num_features):
    """Fast path.

    x_planar:     (2, N, C, H, W) float32 — planar complex layout (real, imag planes).
    class_labels: (N,) int32.
    embed_weight: (num_classes, 5*C) float32.
    Returns (2, N, C, H, W) float32.
    """
    two, N, C, H, W = x_planar.shape
    assert two == 2
    F = num_features
    HW = H * W
    # NOTE: for best performance H*W should be a multiple of 128 (lane-dense
    # stores). Smaller / odd spatial sizes stay correct (full-extent last dim)
    # but fall back to masked partial stores.

    # contiguous flatten of the last two dims: free (no data movement)
    x_flat = x_planar.reshape(2, N, C, HW).astype(jnp.float32)

    # embedding lookup + parameter packing (glue, plain JAX)
    params = embed_weight[class_labels]                       # (N, 5F)
    gamma_rr = params[:, :F]                                  # (N, F)
    gamma_ii = params[:, F:2 * F]
    # params[:, 2F:3F] (the nominal gamma_ri chunk) intentionally unused — reference quirk.
    beta = params[:, 3 * F:].reshape(N, F, 2)                 # interleaved (r, i) pairs
    packed = jnp.stack([gamma_rr, gamma_ii, beta[..., 0], beta[..., 1]],
                       axis=0).reshape(4, N, F, 1).astype(jnp.float32)

    target_block_bytes, vmem_limit, min_steps = _hardware_budget()
    c_tile = _pick_c_tile(N, C, HW, target_block_bytes, min_steps)

    # --- explicit VMEM accounting (double-buffered in + out + param, plus
    # in-kernel centered/product temporaries); fail loudly instead of silently
    # emitting an oversized block.
    data_block = 2 * N * c_tile * HW * 4                      # one (2,N,ct,HW) f32 block
    param_block = 4 * N * c_tile * 128 * 4                    # (4,N,ct,1) lane-padded to 128
    temps = 3 * (N * c_tile * HW * 4)                         # cr/ci + one product temp
    required = 2 * (2 * data_block + param_block) + temps
    if required > vmem_limit:
        # TODO(synk): two-pass scheme for huge N*H*W — accumulate channel stats
        # over an 'arbitrary' N/HW grid axis into scratch, then a separate apply
        # kernel — instead of one all-(N,HW) block per channel tile.
        raise NotImplementedError(
            f"single-block stats need ~{required >> 20} MiB VMEM "
            f"(> limit {vmem_limit >> 20} MiB); reduce N*H*W or add the two-pass scheme")

    grid = (C // c_tile,)
    data_spec = pl.BlockSpec((2, N, c_tile, HW), lambda c: (0, 0, c, 0))
    param_spec = pl.BlockSpec((4, N, c_tile, 1), lambda c: (0, 0, c, 0))

    out = pl.pallas_call(
        _ccn_kernel,
        out_shape=jax.ShapeDtypeStruct((2, N, C, HW), jnp.float32),
        grid_spec=pltpu.PrefetchScalarGridSpec(
            num_scalar_prefetch=0,
            grid=grid,
            in_specs=[data_spec, param_spec],
            out_specs=data_spec,
        ),
        compiler_params=pltpu.CompilerParams(
            dimension_semantics=("parallel",),        # channel tiles are independent
            vmem_limit_bytes=vmem_limit,              # generation-aware scope
        ),
    )(x_flat, packed)

    return out.reshape(2, N, C, H, W)


def complex_conditional_norm_nchw2(x, class_labels, embed_weight, num_features):
    """Drop-in for the PyTorch layout: x (N, C, H, W, 2) -> (N, C, H, W, 2).
    Pays one layout transpose each way; prefer the planar entry point."""
    x_planar = jnp.moveaxis(x, -1, 0)
    out = complex_conditional_norm(x_planar, class_labels, embed_weight, num_features)
    return jnp.moveaxis(out, 0, -1)


def _reference_forward(x, class_labels, embed_weight, F):
    """Pure-JAX mirror of the PyTorch module (training-mode batch norm, affine=False).
    x: (N, C, H, W, 2)."""
    xr, xi = x[..., 0], x[..., 1]
    cm = lambda t: t.mean(axis=0, keepdims=True).mean(axis=2, keepdims=True).mean(axis=3, keepdims=True)
    mr, mi = cm(xr), cm(xi)
    cr, ci = xr - mr, xi - mi
    Vrr, Vii, Vri = cm(cr * cr) + EPS, cm(ci * ci) + EPS, cm(cr * ci)
    s = jnp.sqrt(Vrr * Vii - Vri ** 2)
    t = jnp.sqrt(Vrr + Vii + 2 * s)
    inv_st = 1.0 / (s * t)
    Wrr, Wii, Wri = (Vii + s) * inv_st, (Vrr + s) * inv_st, -Vri * inv_st
    nr = Wrr * cr + Wri * ci
    ni = Wri * cr + Wii * ci
    params = embed_weight[class_labels]
    grr = params[:, :F].reshape(-1, F, 1, 1)
    gii = params[:, F:2 * F].reshape(-1, F, 1, 1)
    gri = grr                                                  # reference quirk
    beta = params[:, 3 * F:].reshape(-1, F, 1, 1, 2)
    out_real = grr * nr + gri * ni
    out_im = gri * out_real + gii * ni                          # uses updated out_real
    return jnp.concatenate([out_real[..., None], out_im[..., None]], axis=-1) + beta


if __name__ == "__main__":
    N, C, H, W = 2, 16, 16, 16          # C=16 -> c_tile=8 -> 2-step parallel grid
    num_classes = 10

    key = jax.random.PRNGKey(0)
    k_x, k_lbl, k_emb = jax.random.split(key, 3)

    x_planar = jax.random.normal(k_x, (2, N, C, H, W), dtype=jnp.float32)
    class_labels = jax.random.randint(k_lbl, (N,), 0, num_classes)

    # deterministic embedding init: first 3*C cols ~ N(1, 0.02), last 2*C cols zero
    embed_weight = jnp.concatenate(
        [1.0 + 0.02 * jax.random.normal(k_emb, (num_classes, 3 * C), dtype=jnp.float32),
         jnp.zeros((num_classes, 2 * C), dtype=jnp.float32)],
        axis=1,
    )

    out = complex_conditional_norm(x_planar, class_labels, embed_weight, C)
    out = jax.block_until_ready(out)

    # reference computed on the interleaved layout (test-only conversion)
    x_nchw2 = jnp.moveaxis(x_planar, 0, -1)                    # (N, C, H, W, 2)
    ref = jnp.moveaxis(_reference_forward(x_nchw2, class_labels, embed_weight, C), -1, 0)

    assert out.shape == (2, N, C, H, W)
    assert np.allclose(np.asarray(out), np.asarray(ref), rtol=1e-4, atol=1e-4), "mismatch vs reference"
    print("KERNEL_OK")
</pallas_src>

<mosaic_0001>
module attributes {stable_mosaic.version = 11 : i64} {
  func.func @_ccn_kernel(%arg0: i32, %arg1: memref<2x2x8x256xf32, #tpu.memory_space<vmem>>, %arg2: memref<4x2x8x1xf32, #tpu.memory_space<vmem>>, %arg3: memref<2x2x8x256xf32, #tpu.memory_space<vmem>>) attributes {dimension_semantics = [#tpu.dimension_semantics<parallel>], iteration_bounds = array<i64: 2>, scalar_prefetch = 0 : i64, scratch_operands = 0 : i64, tpu.core_type = #tpu.core_type<tc>, window_params = [{transform_indices = @transform_0, window_bounds = array<i64: 2, 2, 8, 256>}, {transform_indices = @transform_1, window_bounds = array<i64: 4, 2, 8, 1>}, {transform_indices = @transform_2, window_bounds = array<i64: 2, 2, 8, 256>}]} {
    %c0 = arith.constant 0 : index
    %c0_0 = arith.constant 0 : index
    %c0_1 = arith.constant 0 : index
    %c0_2 = arith.constant 0 : index
    %0 = vector.load %arg1[%c0, %c0_0, %c0_1, %c0_2] : memref<2x2x8x256xf32, #tpu.memory_space<vmem>>, vector<1x2x8x256xf32>
    %1 = vector.shape_cast %0 : vector<1x2x8x256xf32> to vector<2x8x256xf32>
    %c1 = arith.constant 1 : index
    %c0_3 = arith.constant 0 : index
    %c0_4 = arith.constant 0 : index
    %c0_5 = arith.constant 0 : index
    %2 = vector.load %arg1[%c1, %c0_3, %c0_4, %c0_5] : memref<2x2x8x256xf32, #tpu.memory_space<vmem>>, vector<1x2x8x256xf32>
    %3 = vector.shape_cast %2 : vector<1x2x8x256xf32> to vector<2x8x256xf32>
    %cst = arith.constant dense<0.000000e+00> : vector<2x8xf32>
    %4 = vector.multi_reduction <add>, %1, %cst [2] : vector<2x8x256xf32> to vector<2x8xf32>
    %5 = vector.shape_cast %4 : vector<2x8xf32> to vector<2x8x1xf32>
    %cst_6 = arith.constant dense<0.000000e+00> : vector<8x1xf32>
    %6 = vector.multi_reduction <add>, %5, %cst_6 [0] : vector<2x8x1xf32> to vector<8x1xf32>
    %7 = vector.shape_cast %6 : vector<8x1xf32> to vector<1x8x1xf32>
    %cst_7 = arith.constant 0.001953125 : f32
    %8 = vector.broadcast %cst_7 : f32 to vector<1x8x1xf32>
    %9 = arith.mulf %7, %8 : vector<1x8x1xf32>
    %cst_8 = arith.constant dense<0.000000e+00> : vector<2x8xf32>
    %10 = vector.multi_reduction <add>, %3, %cst_8 [2] : vector<2x8x256xf32> to vector<2x8xf32>
    %11 = vector.shape_cast %10 : vector<2x8xf32> to vector<2x8x1xf32>
    %cst_9 = arith.constant dense<0.000000e+00> : vector<8x1xf32>
    %12 = vector.multi_reduction <add>, %11, %cst_9 [0] : vector<2x8x1xf32> to vector<8x1xf32>
    %13 = vector.shape_cast %12 : vector<8x1xf32> to vector<1x8x1xf32>
    %cst_10 = arith.constant 0.001953125 : f32
    %14 = vector.broadcast %cst_10 : f32 to vector<1x8x1xf32>
    %15 = arith.mulf %13, %14 : vector<1x8x1xf32>
    %16 = vector.broadcast %9 : vector<1x8x1xf32> to vector<2x8x256xf32>
    %17 = arith.subf %1, %16 : vector<2x8x256xf32>
    %18 = vector.broadcast %15 : vector<1x8x1xf32> to vector<2x8x256xf32>
    %19 = arith.subf %3, %18 : vector<2x8x256xf32>
    %20 = arith.mulf %17, %17 : vector<2x8x256xf32>
    %cst_11 = arith.constant dense<0.000000e+00> : vector<2x8xf32>
    %21 = vector.multi_reduction <add>, %20, %cst_11 [2] : vector<2x8x256xf32> to vector<2x8xf32>
    %22 = vector.shape_cast %21 : vector<2x8xf32> to vector<2x8x1xf32>
    %cst_12 = arith.constant dense<0.000000e+00> : vector<8x1xf32>
    %23 = vector.multi_reduction <add>, %22, %cst_12 [0] : vector<2x8x1xf32> to vector<8x1xf32>
    %24 = vector.shape_cast %23 : vector<8x1xf32> to vector<1x8x1xf32>
    %cst_13 = arith.constant 0.001953125 : f32
    %25 = vector.broadcast %cst_13 : f32 to vector<1x8x1xf32>
    %26 = arith.mulf %24, %25 : vector<1x8x1xf32>
    %cst_14 = arith.constant 9.99999974E-6 : f32
    %27 = vector.broadcast %cst_14 : f32 to vector<1x8x1xf32>
    %28 = arith.addf %26, %27 : vector<1x8x1xf32>
    %29 = arith.mulf %19, %19 : vector<2x8x256xf32>
    %cst_15 = arith.constant dense<0.000000e+00> : vector<2x8xf32>
    %30 = vector.multi_reduction <add>, %29, %cst_15 [2] : vector<2x8x256xf32> to vector<2x8xf32>
    %31 = vector.shape_cast %30 : vector<2x8xf32> to vector<2x8x1xf32>
    %cst_16 = arith.constant dense<0.000000e+00> : vector<8x1xf32>
    %32 = vector.multi_reduction <add>, %31, %cst_16 [0] : vector<2x8x1xf32> to vector<8x1xf32>
    %33 = vector.shape_cast %32 : vector<8x1xf32> to vector<1x8x1xf32>
    %cst_17 = arith.constant 0.001953125 : f32
    %34 = vector.broadcast %cst_17 : f32 to vector<1x8x1xf32>
    %35 = arith.mulf %33, %34 : vector<1x8x1xf32>
    %cst_18 = arith.constant 9.99999974E-6 : f32
    %36 = vector.broadcast %cst_18 : f32 to vector<1x8x1xf32>
    %37 = arith.addf %35, %36 : vector<1x8x1xf32>
    %38 = arith.mulf %17, %19 : vector<2x8x256xf32>
    %cst_19 = arith.constant dense<0.000000e+00> : vector<2x8xf32>
    %39 = vector.multi_reduction <add>, %38, %cst_19 [2] : vector<2x8x256xf32> to vector<2x8xf32>
    %40 = vector.shape_cast %39 : vector<2x8xf32> to vector<2x8x1xf32>
    %cst_20 = arith.constant dense<0.000000e+00> : vector<8x1xf32>
    %41 = vector.multi_reduction <add>, %40, %cst_20 [0] : vector<2x8x1xf32> to vector<8x1xf32>
    %42 = vector.shape_cast %41 : vector<8x1xf32> to vector<1x8x1xf32>
    %cst_21 = arith.constant 0.001953125 : f32
    %43 = vector.broadcast %cst_21 : f32 to vector<1x8x1xf32>
    %44 = arith.mulf %42, %43 : vector<1x8x1xf32>
    %45 = arith.addf %28, %37 : vector<1x8x1xf32>
    %46 = arith.mulf %28, %37 : vector<1x8x1xf32>
    %47 = arith.mulf %44, %44 : vector<1x8x1xf32>
    %48 = arith.subf %46, %47 : vector<1x8x1xf32>
    %49 = math.sqrt %48 : vector<1x8x1xf32>
    %cst_22 = arith.constant 2.000000e+00 : f32
    %50 = vector.broadcast %cst_22 : f32 to vector<1x8x1xf32>
    %51 = arith.mulf %50, %49 : vector<1x8x1xf32>
    %52 = arith.addf %45, %51 : vector<1x8x1xf32>
    %53 = arith.mulf %48, %52 : vector<1x8x1xf32>
    %54 = math.rsqrt %53 : vector<1x8x1xf32>
    %55 = arith.addf %37, %49 : vector<1x8x1xf32>
    %56 = arith.mulf %55, %54 : vector<1x8x1xf32>
    %57 = arith.addf %28, %49 : vector<1x8x1xf32>
    %58 = arith.mulf %57, %54 : vector<1x8x1xf32>
    %cst_23 = arith.constant 0.000000e+00 : f32
    %59 = vector.broadcast %cst_23 : f32 to vector<1x8x1xf32>
    %60 = arith.subf %59, %44 : vector<1x8x1xf32>
    %61 = arith.mulf %60, %54 : vector<1x8x1xf32>
    %c0_24 = arith.constant 0 : index
    %c0_25 = arith.constant 0 : index
    %c0_26 = arith.constant 0 : index
    %c0_27 = arith.constant 0 : index
    %62 = vector.load %arg2[%c0_24, %c0_25, %c0_26, %c0_27] : memref<4x2x8x1xf32, #tpu.memory_space<vmem>>, vector<1x2x8x1xf32>
    %63 = vector.shape_cast %62 : vector<1x2x8x1xf32> to vector<2x8x1xf32>
    %c1_28 = arith.constant 1 : index
    %c0_29 = arith.constant 0 : index
    %c0_30 = arith.constant 0 : index
    %c0_31 = arith.constant 0 : index
    %64 = vector.load %arg2[%c1_28, %c0_29, %c0_30, %c0_31] : memref<4x2x8x1xf32, #tpu.memory_space<vmem>>, vector<1x2x8x1xf32>
    %65 = vector.shape_cast %64 : vector<1x2x8x1xf32> to vector<2x8x1xf32>
    %c2 = arith.constant 2 : index
    %c0_32 = arith.constant 0 : index
    %c0_33 = arith.constant 0 : index
    %c0_34 = arith.constant 0 : index
    %66 = vector.load %arg2[%c2, %c0_32, %c0_33, %c0_34] : memref<4x2x8x1xf32, #tpu.memory_space<vmem>>, vector<1x2x8x1xf32>
    %67 = vector.shape_cast %66 : vector<1x2x8x1xf32> to vector<2x8x1xf32>
    %c3 = arith.constant 3 : index
    %c0_35 = arith.constant 0 : index
    %c0_36 = arith.constant 0 : index
    %c0_37 = arith.constant 0 : index
    %68 = vector.load %arg2[%c3, %c0_35, %c0_36, %c0_37] : memref<4x2x8x1xf32, #tpu.memory_space<vmem>>, vector<1x2x8x1xf32>
    %69 = vector.shape_cast %68 : vector<1x2x8x1xf32> to vector<2x8x1xf32>
    %70 = arith.addf %56, %61 : vector<1x8x1xf32>
    %71 = vector.broadcast %70 : vector<1x8x1xf32> to vector<2x8x1xf32>
    %72 = arith.mulf %63, %71 : vector<2x8x1xf32>
    %73 = arith.addf %61, %58 : vector<1x8x1xf32>
    %74 = vector.broadcast %73 : vector<1x8x1xf32> to vector<2x8x1xf32>
    %75 = arith.mulf %63, %74 : vector<2x8x1xf32>
    %76 = arith.mulf %63, %72 : vector<2x8x1xf32>
    %77 = vector.broadcast %61 : vector<1x8x1xf32> to vector<2x8x1xf32>
    %78 = arith.mulf %65, %77 : vector<2x8x1xf32>
    %79 = arith.addf %76, %78 : vector<2x8x1xf32>
    %80 = arith.mulf %63, %75 : vector<2x8x1xf32>
    %81 = vector.broadcast %58 : vector<1x8x1xf32> to vector<2x8x1xf32>
    %82 = arith.mulf %65, %81 : vector<2x8x1xf32>
    %83 = arith.addf %80, %82 : vector<2x8x1xf32>
    %84 = vector.broadcast %9 : vector<1x8x1xf32> to vector<2x8x1xf32>
    %85 = arith.mulf %72, %84 : vector<2x8x1xf32>
    %86 = arith.subf %67, %85 : vector<2x8x1xf32>
    %87 = vector.broadcast %15 : vector<1x8x1xf32> to vector<2x8x1xf32>
    %88 = arith.mulf %75, %87 : vector<2x8x1xf32>
    %89 = arith.subf %86, %88 : vector<2x8x1xf32>
    %90 = vector.broadcast %9 : vector<1x8x1xf32> to vector<2x8x1xf32>
    %91 = arith.mulf %79, %90 : vector<2x8x1xf32>
    %92 = arith.subf %69, %91 : vector<2x8x1xf32>
    %93 = vector.broadcast %15 : vector<1x8x1xf32> to vector<2x8x1xf32>
    %94 = arith.mulf %83, %93 : vector<2x8x1xf32>
    %95 = arith.subf %92, %94 : vector<2x8x1xf32>
    %96 = vector.broadcast %72 : vector<2x8x1xf32> to vector<2x8x256xf32>
    %97 = arith.mulf %96, %1 : vector<2x8x256xf32>
    %98 = vector.broadcast %75 : vector<2x8x1xf32> to vector<2x8x256xf32>
    %99 = arith.mulf %98, %3 : vector<2x8x256xf32>
    %100 = arith.addf %97, %99 : vector<2x8x256xf32>
    %101 = vector.broadcast %89 : vector<2x8x1xf32> to vector<2x8x256xf32>
    %102 = arith.addf %100, %101 : vector<2x8x256xf32>
    %c0_38 = arith.constant 0 : index
    %c0_39 = arith.constant 0 : index
    %c0_40 = arith.constant 0 : index
    %c0_41 = arith.constant 0 : index
    %103 = vector.load %arg3[%c0_38, %c0_39, %c0_40, %c0_41] : memref<2x2x8x256xf32, #tpu.memory_space<vmem>>, vector<1x2x8x256xf32>
    %104 = vector.shape_cast %103 : vector<1x2x8x256xf32> to vector<2x8x256xf32>
    %105 = vector.shape_cast %102 : vector<2x8x256xf32> to vector<1x2x8x256xf32>
    tpu.vector_store %arg3[%c0_38, %c0_39, %c0_40, %c0_41], %105 {strides = array<i32>} : memref<2x2x8x256xf32, #tpu.memory_space<vmem>>, vector<1x2x8x256xf32>,
    %106 = vector.broadcast %79 : vector<2x8x1xf32> to vector<2x8x256xf32>
    %107 = arith.mulf %106, %1 : vector<2x8x256xf32>
    %108 = vector.broadcast %83 : vector<2x8x1xf32> to vector<2x8x256xf32>
    %109 = arith.mulf %108, %3 : vector<2x8x256xf32>
    %110 = arith.addf %107, %109 : vector<2x8x256xf32>
    %111 = vector.broadcast %95 : vector<2x8x1xf32> to vector<2x8x256xf32>
    %112 = arith.addf %110, %111 : vector<2x8x256xf32>
    %c1_42 = arith.constant 1 : index
    %c0_43 = arith.constant 0 : index
    %c0_44 = arith.constant 0 : index
    %c0_45 = arith.constant 0 : index
    %113 = vector.load %arg3[%c1_42, %c0_43, %c0_44, %c0_45] : memref<2x2x8x256xf32, #tpu.memory_space<vmem>>, vector<1x2x8x256xf32>
    %114 = vector.shape_cast %113 : vector<1x2x8x256xf32> to vector<2x8x256xf32>
    %115 = vector.shape_cast %112 : vector<2x8x256xf32> to vector<1x2x8x256xf32>
    tpu.vector_store %arg3[%c1_42, %c0_43, %c0_44, %c0_45], %115 {strides = array<i32>} : memref<2x2x8x256xf32, #tpu.memory_space<vmem>>, vector<1x2x8x256xf32>,
    return
  }
  func.func @transform_0(%arg0: i32) -> (i32, i32, i32, i32) {
    %c0_i32 = arith.constant 0 : i32
    %c0_i32_0 = arith.constant 0 : i32
    %c0_i32_1 = arith.constant 0 : i32
    %c0_i32_2 = arith.constant 0 : i32
    return %c0_i32, %c0_i32_0, %arg0, %c0_i32_1 : i32, i32, i32, i32
  }
  func.func @transform_1(%arg0: i32) -> (i32, i32, i32, i32) {
    %c0_i32 = arith.constant 0 : i32
    %c0_i32_0 = arith.constant 0 : i32
    %c0_i32_1 = arith.constant 0 : i32
    %c0_i32_2 = arith.constant 0 : i32
    return %c0_i32, %c0_i32_0, %arg0, %c0_i32_1 : i32, i32, i32, i32
  }
  func.func @transform_2(%arg0: i32) -> (i32, i32, i32, i32) {
    %c0_i32 = arith.constant 0 : i32
    %c0_i32_0 = arith.constant 0 : i32
    %c0_i32_1 = arith.constant 0 : i32
    %c0_i32_2 = arith.constant 0 : i32
    return %c0_i32, %c0_i32_0, %arg0, %c0_i32_1 : i32, i32, i32, i32
  }
}

</mosaic_0001>

<llo_original>
// kernel: tpu_custom_call.1
$region0: #{tpu_custom_call.1}
  #allocation0 [shape = 'u32[]', space=smem, size = 0x4, offset = 0x4, fixed_abs, tag = 'smem constant byte address 0x4 - core index']
  #allocation1 [shape = 'u32[144,128]{1,0:T(1,128)}', space=vmem, size = 0x12000, scoped, tag = 'internal scratch']
  %s0 = inlined_call_operand.vmem [shape: f32[2,2,16,256], index: 0, kind: input, shape index: {}]
  %s1 = inlined_call_operand.vmem [shape: f32[4,2,16,1], index: 1, kind: input, shape index: {}]
  %s2 = inlined_call_operand.hbm [shape: f32[2,2,16,256], index: 2, kind: output, shape index: {}]
  %s3 = sld [smem:[#allocation0]]
  $region102: #{tpu_custom_call.1} parent=0
    _
  %s5 = ssub.s32 1, %s3
  %s6 = scalar_select 0, %s5, %s3
  $region1: #{tpu_custom_call.1} parent=0
    #allocation2 [shape = 'u8[65536]{0}', space=vmem, size = 0x10000, scoped, tag = 'input window, operand 0']
    #allocation3 [shape = 'u8[65536]{0}', space=vmem, size = 0x10000, scoped, tag = 'input window, operand 1']
    #allocation4 [shape = 'u8[65536]{0}', space=vmem, size = 0x10000, scoped, tag = 'output window, operand 0']
    #allocation5 [shape = 's32[2]{0}', space=sflag, size = 0x8, scoped, tag = 'scoped memory for tpu_custom_call.1']
    %7 = vsyncpa [#allocation5], 0
    %s8 = scalar_lea.sflag [#allocation5], 1
    %9 = vsyncpa %s8, 0
    loop: start=0, step=1, limit=4
    $region2: #{tpu_custom_call.1} parent=1 // loop_pre_header
      _
    $region3: #{tpu_custom_call.1} parent=1 // loop_header
      %s11 = sphi 0, %s15
      %p12 = scmp.ge.s32.totalorder %s11, 4
      %s21 = sphi 0, %s23
      %s24 = sphi 0, %s21
      %s25 = sphi 0, %s24
      %s41 = sphi 0, %s25
      %s47 = sphi 0, %s49
      %s50 = sphi 0, %s47
      %s51 = sphi 0, %s50
      %s67 = sphi 0, %s51
      %s73 = sphi 0, %s75
      %s76 = sphi 0, %s73
      %s77 = sphi 0, %s76
      %s93 = sphi 0, %s77
    $region4: #{tpu_custom_call.1} parent=1 // loop_header_branch
      %14 = sbr.rel (%p12) target = $region8
    $region5: #{tpu_custom_call.1} parent=1 // loop_body
      %s16 = ssub.s32 %s11, 1
      %s17 = ssub.s32 %s11, 2
      %s18 = sadd.s32 %s11, 1
      %s19 = ssub.s32 %s11, %s18
      %p20 = scmp.eq.s32.totalorder %s19, 0
      %s22 = sadd.s32 %s21, 1
      %s23 = scalar_select %p20, %s21, %s22
      %p26 = pneg %p20
      %p27 = scmp.eq.s32.totalorder %s11, 1
      %p28 = por %p26, %p27
      %p29 = scmp.ne.s32.totalorder %s21, %s24
      %p30 = scmp.eq.s32.totalorder %s11, 0
      %p31 = por %p29, %p30
      %p32 = scmp.ne.s32.totalorder %s21, %s24
      %p33 = scmp.eq.s32.totalorder %s16, 1
      %p34 = por %p32, %p33
      %p35 = scmp.ne.s32.totalorder %s24, %s25
      %p36 = scmp.eq.s32.totalorder %s16, 0
      %p37 = por %p35, %p36
      %p38 = scmp.ne.s32.totalorder %s24, %s25
      %p39 = scmp.eq.s32.totalorder %s17, 1
      %p40 = por %p38, %p39
      %p42 = scmp.ne.s32.totalorder %s25, %s41
      %p43 = scmp.eq.s32.totalorder %s17, 0
      %p44 = por %p42, %p43
      %s45 = ssub.s32 %s11, %s18
      %p46 = scmp.eq.s32.totalorder %s45, 0
      %s48 = sadd.s32 %s47, 1
      %s49 = scalar_select %p46, %s47, %s48
      %p52 = pneg %p46
      %p53 = scmp.eq.s32.totalorder %s11, 1
      %p54 = por %p52, %p53
      %p55 = scmp.ne.s32.totalorder %s47, %s50
      %p56 = scmp.eq.s32.totalorder %s11, 0
      %p57 = por %p55, %p56
      %p58 = scmp.ne.s32.totalorder %s47, %s50
      %p59 = scmp.eq.s32.totalorder %s16, 1
      %p60 = por %p58, %p59
      %p61 = scmp.ne.s32.totalorder %s50, %s51
      %p62 = scmp.eq.s32.totalorder %s16, 0
      %p63 = por %p61, %p62
      %p64 = scmp.ne.s32.totalorder %s50, %s51
      %p65 = scmp.eq.s32.totalorder %s17, 1
      %p66 = por %p64, %p65
      %p68 = scmp.ne.s32.totalorder %s51, %s67
      %p69 = scmp.eq.s32.totalorder %s17, 0
      %p70 = por %p68, %p69
      %s71 = ssub.s32 %s11, %s18
      %p72 = scmp.eq.s32.totalorder %s71, 0
      %s74 = sadd.s32 %s73, 1
      %s75 = scalar_select %p72, %s73, %s74
      %p78 = pneg %p72
      %p79 = scmp.eq.s32.totalorder %s11, 1
      %p80 = por %p78, %p79
      %p81 = scmp.ne.s32.totalorder %s73, %s76
      %p82 = scmp.eq.s32.totalorder %s11, 0
      %p83 = por %p81, %p82
      %p84 = scmp.ne.s32.totalorder %s73, %s76
      %p85 = scmp.eq.s32.totalorder %s16, 1
      %p86 = por %p84, %p85
      %p87 = scmp.ne.s32.totalorder %s76, %s77
      %p88 = scmp.eq.s32.totalorder %s16, 0
      %p89 = por %p87, %p88
      %p90 = scmp.ne.s32.totalorder %s76, %s77
      %p91 = scmp.eq.s32.totalorder %s17, 1
      %p92 = por %p90, %p91
      %p94 = scmp.ne.s32.totalorder %s77, %s93
      %p95 = scmp.eq.s32.totalorder %s17, 0
      %p96 = por %p94, %p95
      %p97 = scmp.le.s32.totalorder 1, %s11
      %p98 = scmp.lt.s32.totalorder %s11, 3
      %p99 = pnand %p97, %p98
      %p100 = pneg %p99
      // Predicated region
      $region9: #{tpu_custom_call.1} parent=5 // pred_check
        _
      $region10: #{tpu_custom_call.1} parent=5 // pred_check_branch
        %102 = sbr.rel (%p99) target = $region12
      $region11: #{tpu_custom_call.1} parent=5 // pred_region
        %s103 = ssub.s32 %s11, 1
      $region12: #{tpu_custom_call.1} parent=5 // pred_fallthru
        _
      %p104 = scmp.lt.s32.totalorder %s11, 2
      // Predicated region
      $region13: #{tpu_custom_call.1} parent=5 // pred_check
        %p105 = pneg %p104
      $region14: #{tpu_custom_call.1} parent=5 // pred_check_branch
        %107 = sbr.rel (%p105) target = $region16
      $region15: #{tpu_custom_call.1} parent=5 // pred_region
        // Predicated region
        $region17: #{tpu_custom_call.1} parent=15 // pred_check
          %p108 = pneg %p31
        $region18: #{tpu_custom_call.1} parent=15 // pred_check_branch
          %110 = sbr.rel (%p108) target = $region20
        $region19: #{tpu_custom_call.1} parent=15 // pred_region
          %s111 = sand.u32 %s21, 1
          %s112 = sand.u32 %s21, 1
          %s113 = smul.addr %s112, 64
          %s114 = scalar_lea.vmem [#allocation2], %s113
          %s115 = smul.addr %s11, 2
          %s116 = smul.addr %s115, 8
          %s117 = scalar_lea.vmem %s0, %s116
          // Predicated region
          $region21: #{tpu_custom_call.1} parent=19 // pred_check
            _
          $region22: #{tpu_custom_call.1} parent=19 // pred_check_branch
            %119 = sbr.rel (0) target = $region24
          $region23: #{tpu_custom_call.1} parent=19 // pred_region
            // Predicated region
            $region25: #{tpu_custom_call.1} parent=23 // pred_check
              _
            $region26: #{tpu_custom_call.1} parent=23 // pred_check_branch
              %121 = sbr.rel (0) target = $region28
            $region27: #{tpu_custom_call.1} parent=23 // pred_region
              loop: start=0, step=1, limit=1
              $region29: #{tpu_custom_call.1} parent=27 // loop_pre_header
                _
              $region30: #{tpu_custom_call.1} parent=27 // loop_header
                %s123 = sphi 0, %s127
                %p124 = scmp.ge.s32.totalorder %s123, 1
                %s128 = sphi %s117, %s117
                %s129 = sphi %s114, %s114
              $region31: #{tpu_custom_call.1} parent=27 // loop_header_branch
                %126 = sbr.rel (%p124) target = $region35
              $region32: #{tpu_custom_call.1} parent=27 // loop_body
                %v130 = vld [vmem:[%s128] sm:$0xff]
                %131 = vst [vmem:[%s129] sm:$0xff] %v130
                %v132 = vld [vmem:[%s128 + $0x8] sm:$0xff]
                %133 = vst [vmem:[%s129 + $0x8] sm:$0xff] %v132
                %v134 = vld [vmem:[%s128 + $0x20] sm:$0xff]
                %135 = vst [vmem:[%s129 + $0x10] sm:$0xff] %v134
                %v136 = vld [vmem:[%s128 + $0x28] sm:$0xff]
                %137 = vst [vmem:[%s129 + $0x18] sm:$0xff] %v136
                %v138 = vld [vmem:[%s128 + $0x40] sm:$0xff]
                %139 = vst [vmem:[%s129 + $0x20] sm:$0xff] %v138
                %v140 = vld [vmem:[%s128 + $0x48] sm:$0xff]
                %141 = vst [vmem:[%s129 + $0x28] sm:$0xff] %v140
                %v142 = vld [vmem:[%s128 + $0x60] sm:$0xff]
                %143 = vst [vmem:[%s129 + $0x30] sm:$0xff] %v142
                %v144 = vld [vmem:[%s128 + $0x68] sm:$0xff]
                %145 = vst [vmem:[%s129 + $0x38] sm:$0xff] %v144
              $region33: #{tpu_custom_call.1} parent=27 // loop_footer
                %s127 = sadd.s32 1, %s123
              $region34: #{tpu_custom_call.1} parent=27 // loop_footer_branch
                %122 = sbr.rel target = $region30
              $region35: #{tpu_custom_call.1} parent=27 // loop_exit
                _
            $region28: #{tpu_custom_call.1} parent=23 // pred_fallthru
              _
            // Predicated region
            $region36: #{tpu_custom_call.1} parent=23 // pred_check
              _
            $region37: #{tpu_custom_call.1} parent=23 // pred_check_branch
              %147 = sbr.rel target = $region39
            $region38: #{tpu_custom_call.1} parent=23 // pred_region
              _
            $region39: #{tpu_custom_call.1} parent=23 // pred_fallthru
              _
          $region24: #{tpu_custom_call.1} parent=19 // pred_fallthru
            _
          %148 = vnop
        $region20: #{tpu_custom_call.1} parent=15 // pred_fallthru
          _
        // Predicated region
        $region40: #{tpu_custom_call.1} parent=15 // pred_check
          %p149 = pneg %p57
        $region41: #{tpu_custom_call.1} parent=15 // pred_check_branch
          %151 = sbr.rel (%p149) target = $region43
        $region42: #{tpu_custom_call.1} parent=15 // pred_region
          %s152 = sand.u32 %s47, 1
          %s153 = sand.u32 %s47, 1
          %s154 = smul.addr %s153, 64
          %s155 = scalar_lea.vmem [#allocation3], %s154
          %s156 = smul.addr %s11, 8
          %s157 = scalar_lea.vmem %s1, %s156
          // Predicated region
          $region44: #{tpu_custom_call.1} parent=42 // pred_check
            _
          $region45: #{tpu_custom_call.1} parent=42 // pred_check_branch
            %159 = sbr.rel (0) target = $region47
          $region46: #{tpu_custom_call.1} parent=42 // pred_region
            // Predicated region
            $region48: #{tpu_custom_call.1} parent=46 // pred_check
              _
            $region49: #{tpu_custom_call.1} parent=46 // pred_check_branch
              %161 = sbr.rel (0) target = $region51
            $region50: #{tpu_custom_call.1} parent=46 // pred_region
              // Predicated region
              $region63: #{tpu_custom_call.1} parent=50 // pred_check
                _
              $region64: #{tpu_custom_call.1} parent=50 // pred_check_branch
                %191 = sbr.rel (0) target = $region66
              $region65: #{tpu_custom_call.1} parent=50 // pred_region
                loop: start=0, step=1, limit=1
                $region67: #{tpu_custom_call.1} parent=65 // loop_pre_header
                  _
                $region68: #{tpu_custom_call.1} parent=65 // loop_header
                  %s193 = sphi 0, %s197
                  %p194 = scmp.ge.s32.totalorder %s193, 1
                  %s198 = sphi %s157, %s157
                  %s199 = sphi %s155, %s155
                $region69: #{tpu_custom_call.1} parent=65 // loop_header_branch
                  %196 = sbr.rel (%p194) target = $region73
                $region70: #{tpu_custom_call.1} parent=65 // loop_body
                  %v200 = vld [vmem:[%s198] sm:$0xff]
                  %201 = vst [vmem:[%s199] sm:$0xff] %v200
                  %v202 = vld [vmem:[%s198 + $0x10] sm:$0xff]
                  %203 = vst [vmem:[%s199 + $0x8] sm:$0xff] %v202
                  %v204 = vld [vmem:[%s198 + $0x20] sm:$0xff]
                  %205 = vst [vmem:[%s199 + $0x10] sm:$0xff] %v204
                  %v206 = vld [vmem:[%s198 + $0x30] sm:$0xff]
                  %207 = vst [vmem:[%s199 + $0x18] sm:$0xff] %v206
                  %v208 = vld [vmem:[%s198 + $0x40] sm:$0xff]
                  %209 = vst [vmem:[%s199 + $0x20] sm:$0xff] %v208
                  %v210 = vld [vmem:[%s198 + $0x50] sm:$0xff]
                  %211 = vst [vmem:[%s199 + $0x28] sm:$0xff] %v210
                  %v212 = vld [vmem:[%s198 + $0x60] sm:$0xff]
                  %213 = vst [vmem:[%s199 + $0x30] sm:$0xff] %v212
                  %v214 = vld [vmem:[%s198 + $0x70] sm:$0xff]
                  %215 = vst [vmem:[%s199 + $0x38] sm:$0xff] %v214
                $region71: #{tpu_custom_call.1} parent=65 // loop_footer
                  %s197 = sadd.s32 1, %s193
                $region72: #{tpu_custom_call.1} parent=65 // loop_footer_branch
                  %192 = sbr.rel target = $region68
                $region73: #{tpu_custom_call.1} parent=65 // loop_exit
                  _
              $region66: #{tpu_custom_call.1} parent=50 // pred_fallthru
                _
              // Predicated region
              $region74: #{tpu_custom_call.1} parent=50 // pred_check
                _
              $region75: #{tpu_custom_call.1} parent=50 // pred_check_branch
                %217 = sbr.rel target = $region77
              $region76: #{tpu_custom_call.1} parent=50 // pred_region
                _
              $region77: #{tpu_custom_call.1} parent=50 // pred_fallthru
                _
            $region51: #{tpu_custom_call.1} parent=46 // pred_fallthru
              _
            // Predicated region
            $region52: #{tpu_custom_call.1} parent=46 // pred_check
              _
            $region53: #{tpu_custom_call.1} parent=46 // pred_check_branch
              %163 = sbr.rel target = $region55
            $region54: #{tpu_custom_call.1} parent=46 // pred_region
              %s165 = ssub.s32 256, 1
              loop: start=0, step=1, limit=1
              $region56: #{tpu_custom_call.1} parent=54 // loop_pre_header
                _
              $region57: #{tpu_custom_call.1} parent=54 // loop_header
                %s167 = sphi 0, %s171
                %p168 = scmp.ge.s32.totalorder %s167, 1
                %s172 = sphi %s157, %s157
                %s173 = sphi %s155, %s155
              $region58: #{tpu_custom_call.1} parent=54 // loop_header_branch
                %170 = sbr.rel (%p168) target = $region62
              $region59: #{tpu_custom_call.1} parent=54 // loop_body
                %v174 = vld [vmem:[%s172] sm:%s165]
                %175 = vst [vmem:[%s173] sm:%s165] %v174
                %v176 = vld [vmem:[%s172 + $0x10] sm:%s165]
                %177 = vst [vmem:[%s173 + $0x8] sm:%s165] %v176
                %v178 = vld [vmem:[%s172 + $0x20] sm:%s165]
                %179 = vst [vmem:[%s173 + $0x10] sm:%s165] %v178
                %v180 = vld [vmem:[%s172 + $0x30] sm:%s165]
                %181 = vst [vmem:[%s173 + $0x18] sm:%s165] %v180
                %v182 = vld [vmem:[%s172 + $0x40] sm:%s165]
                %183 = vst [vmem:[%s173 + $0x20] sm:%s165] %v182
                %v184 = vld [vmem:[%s172 + $0x50] sm:%s165]
                %185 = vst [vmem:[%s173 + $0x28] sm:%s165] %v184
                %v186 = vld [vmem:[%s172 + $0x60] sm:%s165]
                %187 = vst [vmem:[%s173 + $0x30] sm:%s165] %v186
                %v188 = vld [vmem:[%s172 + $0x70] sm:%s165]
                %189 = vst [vmem:[%s173 + $0x38] sm:%s165] %v188
              $region60: #{tpu_custom_call.1} parent=54 // loop_footer
                %s171 = sadd.s32 1, %s167
              $region61: #{tpu_custom_call.1} parent=54 // loop_footer_branch
                %166 = sbr.rel target = $region57
              $region62: #{tpu_custom_call.1} parent=54 // loop_exit
                _
            $region55: #{tpu_custom_call.1} parent=46 // pred_fallthru
              _
          $region47: #{tpu_custom_call.1} parent=42 // pred_fallthru
            _
          %218 = vnop
        $region43: #{tpu_custom_call.1} parent=15 // pred_fallthru
          _
      $region16: #{tpu_custom_call.1} parent=5 // pred_fallthru
        _
      %p219 = scmp.le.s32.totalorder 1, %s11
      %p220 = scmp.lt.s32.totalorder %s11, 3
      %p221 = pnand %p219, %p220
      %p222 = pneg %p221
      // Predicated region
      $region78: #{tpu_custom_call.1} parent=5 // pred_check
        _
      $region79: #{tpu_custom_call.1} parent=5 // pred_check_branch
        %224 = sbr.rel (%p221) target = $region81
      $region80: #{tpu_custom_call.1} parent=5 // pred_region
        %s225 = ssub.s32 %s11, 1
        %s226 = sand.u32 %s24, 1
        %s227 = sand.u32 %s24, 1
        %s228 = smul.addr %s227, 64
        %s229 = scalar_lea.vmem [#allocation2], %s228
        // Predicated region
        $region82: #{tpu_custom_call.1} parent=80 // pred_check
          %p230 = pneg %p37
        $region83: #{tpu_custom_call.1} parent=80 // pred_check_branch
          %232 = sbr.rel (%p230) target = $region85
        $region84: #{tpu_custom_call.1} parent=80 // pred_region
          _
        $region85: #{tpu_custom_call.1} parent=80 // pred_fallthru
          _
        %s233 = sand.u32 %s50, 1
        %s234 = sand.u32 %s50, 1
        %s235 = smul.addr %s234, 64
        %s236 = scalar_lea.vmem [#allocation3], %s235
        // Predicated region
        $region86: #{tpu_custom_call.1} parent=80 // pred_check
          %p237 = pneg %p63
        $region87: #{tpu_custom_call.1} parent=80 // pred_check_branch
          %239 = sbr.rel (%p237) target = $region89
        $region88: #{tpu_custom_call.1} parent=80 // pred_region
          _
        $region89: #{tpu_custom_call.1} parent=80 // pred_fallthru
          _
        %s240 = sand.u32 %s24, 1
        %s241 = sand.u32 %s24, 1
        %s242 = smul.addr %s241, 64
        %s243 = scalar_lea.vmem [#allocation2], %s242
        %p244 = pneg %p37
        %p245 = pneg %p34
        %s246 = sand.u32 %s50, 1
        %s247 = sand.u32 %s50, 1
        %s248 = smul.addr %s247, 64
        %s249 = scalar_lea.vmem [#allocation3], %s248
        %p250 = pneg %p63
        %p251 = pneg %p60
        %p252 = pneg %p89
        %p253 = pneg %p86
        %s254 = sand.u32 %s76, 1
        %s255 = scalar_lea.sflag [#allocation5], %s254
        %s256 = sand.u32 %s76, 1
        %s257 = smul.addr %s256, 64
        %s258 = scalar_lea.vmem [#allocation4], %s257
        %v259 = vld [vmem:[%s229] sm:$0xff]
        %v260 = vld [vmem:[%s229 + $0x8] sm:$0xff]
        %v261 = vld [vmem:[%s229 + $0x10] sm:$0xff]
        %v262 = vld [vmem:[%s229 + $0x18] sm:$0xff]
        %s263 = scalar_lea.vmem %s229, 32 [#allocation2]
        %v264 = vld [vmem:[%s263] sm:$0xff]
        %v265 = vld [vmem:[%s263 + $0x8] sm:$0xff]
        %v266 = vld [vmem:[%s263 + $0x10] sm:$0xff]
        %v267 = vld [vmem:[%s263 + $0x18] sm:$0xff]
        %v268 = vadd.f32 %v259, %v260
        %269 = vadd.xlane.f32.xlu0 %v268
        %v270 = vpop.xlane.xlu0 %269
        %v271 = vadd.f32 %v261, %v262
        %272 = vadd.xlane.f32.xlu0 %v271
        %v273 = vpop.xlane.xlu0 %272
        %v274 = vadd.f32 %v270, %v273
        %v275 = vmul.f32 %v274, 0.001953125
        %v276 = vadd.f32 %v264, %v265
        %277 = vadd.xlane.f32.xlu0 %v276
        %v278 = vpop.xlane.xlu0 %277
        %v279 = vadd.f32 %v266, %v267
        %280 = vadd.xlane.f32.xlu0 %v279
        %v281 = vpop.xlane.xlu0 %280
        %v282 = vadd.f32 %v278, %v281
        %v283 = vmul.f32 %v282, 0.001953125
        %v284 = vsub.f32 %v259, %v275
        %v285 = vsub.f32 %v260, %v275
        %v286 = vsub.f32 %v261, %v275
        %v287 = vsub.f32 %v262, %v275
        %v288 = vsub.f32 %v264, %v283
        %v289 = vsub.f32 %v265, %v283
        %v290 = vsub.f32 %v266, %v283
        %v291 = vsub.f32 %v267, %v283
        %v292 = vmul.f32 %v284, %v284
        %v293 = vmul.f32 %v285, %v285
        %v294 = vmul.f32 %v286, %v286
        %v295 = vmul.f32 %v287, %v287
        %v296 = vadd.f32 %v292, %v293
        %297 = vadd.xlane.f32.xlu0 %v296
        %v298 = vpop.xlane.xlu0 %297
        %v299 = vadd.f32 %v294, %v295
        %300 = vadd.xlane.f32.xlu0 %v299
        %v301 = vpop.xlane.xlu0 %300
        %v302 = vadd.f32 %v298, %v301
        %v303 = vmul.f32 %v302, 0.001953125
        %v304 = vadd.f32 %v303, 1e-05
        %v305 = vmul.f32 %v288, %v288
        %v306 = vmul.f32 %v289, %v289
        %v307 = vmul.f32 %v290, %v290
        %v308 = vmul.f32 %v291, %v291
        %v309 = vadd.f32 %v305, %v306
        %310 = vadd.xlane.f32.xlu0 %v309
        %v311 = vpop.xlane.xlu0 %310
        %v312 = vadd.f32 %v307, %v308
        %313 = vadd.xlane.f32.xlu0 %v312
        %v314 = vpop.xlane.xlu0 %313
        %v315 = vadd.f32 %v311, %v314
        %v316 = vmul.f32 %v315, 0.001953125
        %v317 = vadd.f32 %v316, 1e-05
        %v318 = vmul.f32 %v284, %v288
        %v319 = vmul.f32 %v285, %v289
        %v320 = vmul.f32 %v286, %v290
        %v321 = vmul.f32 %v287, %v291
        %v322 = vadd.f32 %v318, %v319
        %323 = vadd.xlane.f32.xlu0 %v322
        %v324 = vpop.xlane.xlu0 %323
        %v325 = vadd.f32 %v320, %v321
        %326 = vadd.xlane.f32.xlu0 %v325
        %v327 = vpop.xlane.xlu0 %326
        %v328 = vadd.f32 %v324, %v327
        %v329 = vmul.f32 %v328, 0.001953125
        %v330 = vadd.f32 %v304, %v317
        %v331 = vmul.f32 %v304, %v317
        %v332 = vmul.f32 %v329, %v329
        %v333 = vsub.f32 %v331, %v332
        %v334 = vrsqrt.pop %v333
        %v335 = vmul.f32 %v333, %v334
        %vm336 = vcmp.eq.f32.partialorder %v333, inf
        %v337 = vsel %vm336, %v333, %v335
        %vm338 = vcmp.eq.f32.partialorder %v333, 0.0
        %v339 = vand.u32 %v333, 2147483648
        %v340 = vsel %vm338, %v339, %v337
        %v341 = vmul.f32 %v340, 2.0
        %v342 = vadd.f32 %v330, %v341
        %v343 = vmul.f32 %v333, %v342
        %v344 = vrsqrt.pop %v343
        %v345 = vadd.f32 %v317, %v340
        %v346 = vmul.f32 %v345, %v344
        %v347 = vadd.f32 %v304, %v340
        %v348 = vmul.f32 %v347, %v344
        %v349 = vsub.f32 0.0, %v329
        %v350 = vmul.f32 %v349, %v344
        %v351 = vld [vmem:[%s236] sm:$0xff]
        %v352 = vld [vmem:[%s236 + $0x8] sm:$0xff]
        %s353 = scalar_lea.vmem %s236, 16 [#allocation3]
        %v354 = vld [vmem:[%s353] sm:$0xff]
        %v355 = vld [vmem:[%s353 + $0x8] sm:$0xff]
        %s356 = scalar_lea.vmem %s236, 32 [#allocation3]
        %v357 = vld [vmem:[%s356] sm:$0xff]
        %v358 = vld [vmem:[%s356 + $0x8] sm:$0xff]
        %s359 = scalar_lea.vmem %s236, 48 [#allocation3]
        %v360 = vld [vmem:[%s359] sm:$0xff]
        %v361 = vld [vmem:[%s359 + $0x8] sm:$0xff]
        %v362 = vadd.f32 %v346, %v350
        %v363 = vmul.f32 %v351, %v362
        %v364 = vmul.f32 %v352, %v362
        %v365 = vadd.f32 %v350, %v348
        %v366 = vmul.f32 %v351, %v365
        %v367 = vmul.f32 %v352, %v365
        %v368 = vmul.f32 %v351, %v363
        %v369 = vmul.f32 %v352, %v364
        %v370 = vmul.f32 %v354, %v350
        %v371 = vmul.f32 %v355, %v350
        %v372 = vadd.f32 %v368, %v370
        %v373 = vadd.f32 %v369, %v371
        %v374 = vmul.f32 %v351, %v366
        %v375 = vmul.f32 %v352, %v367
        %v376 = vmul.f32 %v354, %v348
        %v377 = vmul.f32 %v355, %v348
        %v378 = vadd.f32 %v374, %v376
        %v379 = vadd.f32 %v375, %v377
        %v380 = vmul.f32 %v363, %v275
        %v381 = vmul.f32 %v364, %v275
        %v382 = vsub.f32 %v357, %v380
        %v383 = vsub.f32 %v358, %v381
        %v384 = vmul.f32 %v366, %v283
        %v385 = vmul.f32 %v367, %v283
        %v386 = vsub.f32 %v382, %v384
        %v387 = vsub.f32 %v383, %v385
        %v388 = vmul.f32 %v372, %v275
        %v389 = vmul.f32 %v373, %v275
        %v390 = vsub.f32 %v360, %v388
        %v391 = vsub.f32 %v361, %v389
        %v392 = vmul.f32 %v378, %v283
        %v393 = vmul.f32 %v379, %v283
        %v394 = vsub.f32 %v390, %v392
        %v395 = vsub.f32 %v391, %v393
        %397 = vset.pattern.permute.xlu0 0
        %398 = vperm.xlu0 %397, %v363
        %v399 = vpop.permute.xlu0 %398
        %402 = vset.pattern.permute.xlu0 0
        %403 = vperm.xlu0 %402, %v364
        %v404 = vpop.permute.xlu0 %403
        %v406 = vmul.f32 %v399, %v259
        %v407 = vmul.f32 %v399, %v260
        %v408 = vmul.f32 %v404, %v261
        %v409 = vmul.f32 %v404, %v262
        %411 = vset.pattern.permute.xlu0 0
        %412 = vperm.xlu0 %411, %v366
        %v413 = vpop.permute.xlu0 %412
        %416 = vset.pattern.permute.xlu0 0
        %417 = vperm.xlu0 %416, %v367
        %v418 = vpop.permute.xlu0 %417
        %v420 = vmul.f32 %v413, %v264
        %v421 = vmul.f32 %v413, %v265
        %v422 = vmul.f32 %v418, %v266
        %v423 = vmul.f32 %v418, %v267
        %v424 = vadd.f32 %v406, %v420
        %v425 = vadd.f32 %v407, %v421
        %v426 = vadd.f32 %v408, %v422
        %v427 = vadd.f32 %v409, %v423
        %429 = vset.pattern.permute.xlu0 0
        %430 = vperm.xlu0 %429, %v386
        %v431 = vpop.permute.xlu0 %430
        %434 = vset.pattern.permute.xlu0 0
        %435 = vperm.xlu0 %434, %v387
        %v436 = vpop.permute.xlu0 %435
        %v438 = vadd.f32 %v424, %v431
        %v439 = vadd.f32 %v425, %v431
        %v440 = vadd.f32 %v426, %v436
        %v441 = vadd.f32 %v427, %v436
        %442 = vst [vmem:[%s258] sm:$0xff] %v438
        %443 = vst [vmem:[%s258 + $0x8] sm:$0xff] %v439
        %444 = vst [vmem:[%s258 + $0x10] sm:$0xff] %v440
        %445 = vst [vmem:[%s258 + $0x18] sm:$0xff] %v441
        %447 = vset.pattern.permute.xlu0 0
        %448 = vperm.xlu0 %447, %v372
        %v449 = vpop.permute.xlu0 %448
        %452 = vset.pattern.permute.xlu0 0
        %453 = vperm.xlu0 %452, %v373
        %v454 = vpop.permute.xlu0 %453
        %v456 = vmul.f32 %v449, %v259
        %v457 = vmul.f32 %v449, %v260
        %v458 = vmul.f32 %v454, %v261
        %v459 = vmul.f32 %v454, %v262
        %461 = vset.pattern.permute.xlu0 0
        %462 = vperm.xlu0 %461, %v378
        %v463 = vpop.permute.xlu0 %462
        %466 = vset.pattern.permute.xlu0 0
        %467 = vperm.xlu0 %466, %v379
        %v468 = vpop.permute.xlu0 %467
        %v470 = vmul.f32 %v463, %v264
        %v471 = vmul.f32 %v463, %v265
        %v472 = vmul.f32 %v468, %v266
        %v473 = vmul.f32 %v468, %v267
        %v474 = vadd.f32 %v456, %v470
        %v475 = vadd.f32 %v457, %v471
        %v476 = vadd.f32 %v458, %v472
        %v477 = vadd.f32 %v459, %v473
        %479 = vset.pattern.permute.xlu0 0
        %480 = vperm.xlu0 %479, %v394
        %v481 = vpop.permute.xlu0 %480
        %484 = vset.pattern.permute.xlu0 0
        %485 = vperm.xlu0 %484, %v395
        %v486 = vpop.permute.xlu0 %485
        %v488 = vadd.f32 %v474, %v481
        %v489 = vadd.f32 %v475, %v481
        %v490 = vadd.f32 %v476, %v486
        %v491 = vadd.f32 %v477, %v486
        %s492 = scalar_lea.vmem %s258, 32 [#allocation4]
        %493 = vst [vmem:[%s492] sm:$0xff] %v488
        %494 = vst [vmem:[%s492 + $0x8] sm:$0xff] %v489
        %495 = vst [vmem:[%s492 + $0x10] sm:$0xff] %v490
        %496 = vst [vmem:[%s492 + $0x18] sm:$0xff] %v491
        %s497 = sand.u32 %s76, 1
        %s498 = scalar_lea.sflag [#allocation5], %s497
        %s499 = sand.u32 %s76, 1
        %s500 = smul.addr %s499, 64
        %s501 = scalar_lea.vmem [#allocation4], %s500
        // Predicated region
        $region90: #{tpu_custom_call.1} parent=80 // pred_check
          %p502 = pneg %p86
        $region91: #{tpu_custom_call.1} parent=80 // pred_check_branch
          %504 = sbr.rel (%p502) target = $region93
        $region92: #{tpu_custom_call.1} parent=80 // pred_region
          %s506 = ssub.s32 1024, 1024
          %507 = vsyncadd %s498, %s506
          %s508 = smul.addr %s16, 2
          %s509 = smul.addr %s508, 128
          %s510 = scalar_lea.hbm %s2, %s509
          %s511 = sshll.u32 %s501, 4
          %s512 = int_to_ptr.vmem [resolvable:$true] %s511
          %517 = dma.vmem_to_hbm [thread:$0]  %s512, 1024, %s510, %s498, 256, 512, 16
        $region93: #{tpu_custom_call.1} parent=80 // pred_fallthru
          _
      $region81: #{tpu_custom_call.1} parent=5 // pred_fallthru
        _
      %p518 = scmp.le.s32.totalorder 2, %s11
      // Predicated region
      $region94: #{tpu_custom_call.1} parent=5 // pred_check
        %p519 = pneg %p518
      $region95: #{tpu_custom_call.1} parent=5 // pred_check_branch
        %521 = sbr.rel (%p519) target = $region97
      $region96: #{tpu_custom_call.1} parent=5 // pred_region
        %s522 = ssub.s32 %s11, 2
        // Predicated region
        $region98: #{tpu_custom_call.1} parent=96 // pred_check
          %p523 = pneg %p92
        $region99: #{tpu_custom_call.1} parent=96 // pred_check_branch
          %525 = sbr.rel (%p523) target = $region101
        $region100: #{tpu_custom_call.1} parent=96 // pred_region
          %s526 = sand.u32 %s77, 1
          %s527 = scalar_lea.sflag [#allocation5], %s526
          %s528 = sand.u32 %s77, 1
          %s529 = smul.addr %s528, 64
          %s530 = scalar_lea.vmem [#allocation4], %s529
          %531 = dma.done %s527, 1024
        $region101: #{tpu_custom_call.1} parent=96 // pred_fallthru
          _
      $region97: #{tpu_custom_call.1} parent=5 // pred_fallthru
        _
    $region6: #{tpu_custom_call.1} parent=1 // loop_footer
      %s15 = sadd.s32 1, %s11
    $region7: #{tpu_custom_call.1} parent=1 // loop_footer_branch
      %10 = sbr.rel target = $region3
    $region8: #{tpu_custom_call.1} parent=1 // loop_exit
      _
    %532 = vsyncpa [#allocation5], 1
    %s533 = scalar_lea.sflag [#allocation5], 1
    %534 = vsyncpa %s533, 1

</llo_original>
